<compile_context>
chip_gen: v7x
topology: tpu7x:2x2x1
jax: 0.10.0
libtpu: 0.0.40
codegen_flags: <defaults>
</compile_context>

<pallas_src>
import math

import jax
import jax.numpy as jnp
from jax import lax
from jax.experimental import pallas as pl
from jax.experimental.pallas import tpu as pltpu

P_DROP = 0.3
# keep iff 23 uniform bits >= P_DROP * 2^23  (keep-rate = 0.7 to ~5e-8)
_DROP_THRESH = int(P_DROP * (1 << 23))


def _fmix32(x):
    """murmur3 finalizer — full-avalanche 32-bit mixer (uint32 in/out)."""
    x = x ^ (x >> jnp.uint32(16))
    x = x * jnp.uint32(0x85EBCA6B)
    x = x ^ (x >> jnp.uint32(13))
    x = x * jnp.uint32(0xC2B2AE35)
    x = x ^ (x >> jnp.uint32(16))
    return x


def sdpa_dropout_kernel(seed_ref, q_ref, k_ref, v_ref, o_ref):
    b = pl.program_id(0)

    q = q_ref[0]          # (Lq, D)  f32
    k = k_ref[0]          # (Lk, D)  f32
    v = v_ref[0]          # (Lk, Dv) f32
    lq, d = q.shape
    lk = k.shape[0]

    # PyTorch: scaled_qk = qk.div(rsqrt(D)) == qk * sqrt(D).
    # Apply the scale to the smaller of (Lq, D) and (Lq, Lk).
    scale = jnp.float32(math.sqrt(d))
    if lk >= d:
        q = q * scale

    # qk = query @ key^T : contract over D directly (no transpose of K),
    # bf16 MXU inputs, f32 accumulation.
    s = lax.dot_general(
        q.astype(jnp.bfloat16),
        k.astype(jnp.bfloat16),
        dimension_numbers=(((1,), (1,)), ((), ())),
        preferred_element_type=jnp.float32,
    )                                                         # (Lq, Lk)
    if lk < d:
        s = s * scale

    # numerically stable softmax over the last axis
    m = jnp.max(s, axis=-1, keepdims=True)
    e = jnp.exp(s - m)
    denom = jnp.sum(e, axis=-1, keepdims=True)
    # fold dropout's 1/(1-p) rescale into the denominator; approx recip -> EUP
    inv = pl.reciprocal(denom * jnp.float32(1.0 - P_DROP), approx=True)

    # dropout mask: counter-based hash PRNG, integer-space compare
    row = lax.broadcasted_iota(jnp.int32, (lq, lk), 0)
    col = lax.broadcasted_iota(jnp.int32, (lq, lk), 1)
    idx = (row * lk + col).astype(jnp.uint32)
    salt = (
        seed_ref[0].astype(jnp.uint32) * jnp.uint32(0x9E3779B1)
        + (b + 1).astype(jnp.uint32) * jnp.uint32(0x85EBCA77)
    )
    h = _fmix32(idx * jnp.uint32(0x27D4EB2F) + salt)
    bits = (h & jnp.uint32(0x7FFFFF)).astype(jnp.int32)       # 23 uniform bits
    keep = bits >= jnp.int32(_DROP_THRESH)

    p = jnp.where(keep, e * inv, jnp.float32(0.0))            # (Lq, Lk)

    # output = dropout_qk @ value : bf16 MXU inputs, f32 accumulation
    o_ref[0] = jnp.dot(
        p.astype(jnp.bfloat16),
        v.astype(jnp.bfloat16),
        preferred_element_type=jnp.float32,
    ).astype(o_ref.dtype)


def sdpa_dropout(query, key, value, seed=0):
    B, Lq, D = query.shape
    _, Lk, _ = key.shape
    Dv = value.shape[-1]

    grid_spec = pltpu.PrefetchScalarGridSpec(
        num_scalar_prefetch=1,
        grid=(B,),
        in_specs=[
            pl.BlockSpec((1, Lq, D), lambda b, seed: (b, 0, 0)),
            pl.BlockSpec((1, Lk, D), lambda b, seed: (b, 0, 0)),
            pl.BlockSpec((1, Lk, Dv), lambda b, seed: (b, 0, 0)),
        ],
        out_specs=pl.BlockSpec((1, Lq, Dv), lambda b, seed: (b, 0, 0)),
    )

    return pl.pallas_call(
        sdpa_dropout_kernel,
        out_shape=jax.ShapeDtypeStruct((B, Lq, Dv), jnp.float32),
        grid_spec=grid_spec,
        compiler_params=pltpu.CompilerParams(
            dimension_semantics=("parallel",)
        ),
    )(jnp.array([seed], jnp.int32), query, key, value)


if __name__ == "__main__":
    # Small shapes consistent with the module's (B, Lq/Lk, D/Dv) convention
    # (scaled down from query (8,196,768), key (8,25,768), value (8,25,3072)).
    B, Lq, Lk, D, Dv = 2, 64, 32, 128, 256

    root = jax.random.PRNGKey(0)
    kq, kk, kv = jax.random.split(root, 3)
    query = jax.random.normal(kq, (B, Lq, D), dtype=jnp.float32)
    key = jax.random.normal(kk, (B, Lk, D), dtype=jnp.float32)
    value = jax.random.normal(kv, (B, Lk, Dv), dtype=jnp.float32)

    out = sdpa_dropout(query, key, value, seed=0)
    jax.block_until_ready(out)

    assert out.shape == (B, Lq, Dv)
    assert out.dtype == jnp.float32
    assert bool(jnp.all(jnp.isfinite(out)))
    print("KERNEL_OK")
</pallas_src>

<mosaic_0001>
module attributes {stable_mosaic.version = 11 : i64} {
  func.func @sdpa_dropout_kernel(%arg0: i32, %arg1: memref<1xi32, #tpu.memory_space<smem>>, %arg2: memref<1x64x128xf32, #tpu.memory_space<vmem>>, %arg3: memref<1x32x128xf32, #tpu.memory_space<vmem>>, %arg4: memref<1x32x256xf32, #tpu.memory_space<vmem>>, %arg5: memref<1x64x256xf32, #tpu.memory_space<vmem>>) attributes {dimension_semantics = [#tpu.dimension_semantics<parallel>], iteration_bounds = array<i64: 2>, scalar_prefetch = 1 : i64, scratch_operands = 0 : i64, tpu.core_type = #tpu.core_type<tc>, window_params = [{transform_indices = @transform_0, window_bounds = array<i64: 1, 64, 128>}, {transform_indices = @transform_1, window_bounds = array<i64: 1, 32, 128>}, {transform_indices = @transform_2, window_bounds = array<i64: 1, 32, 256>}, {transform_indices = @transform_3, window_bounds = array<i64: 1, 64, 256>}]} {
    %c0 = arith.constant 0 : index
    %c0_0 = arith.constant 0 : index
    %c0_1 = arith.constant 0 : index
    %0 = vector.load %arg2[%c0, %c0_0, %c0_1] : memref<1x64x128xf32, #tpu.memory_space<vmem>>, vector<1x64x128xf32>
    %1 = vector.shape_cast %0 : vector<1x64x128xf32> to vector<64x128xf32>
    %c0_2 = arith.constant 0 : index
    %c0_3 = arith.constant 0 : index
    %c0_4 = arith.constant 0 : index
    %2 = vector.load %arg3[%c0_2, %c0_3, %c0_4] : memref<1x32x128xf32, #tpu.memory_space<vmem>>, vector<1x32x128xf32>
    %3 = vector.shape_cast %2 : vector<1x32x128xf32> to vector<32x128xf32>
    %c0_5 = arith.constant 0 : index
    %c0_6 = arith.constant 0 : index
    %c0_7 = arith.constant 0 : index
    %4 = vector.load %arg4[%c0_5, %c0_6, %c0_7] : memref<1x32x256xf32, #tpu.memory_space<vmem>>, vector<1x32x256xf32>
    %5 = vector.shape_cast %4 : vector<1x32x256xf32> to vector<32x256xf32>
    %6 = arith.truncf %1 : vector<64x128xf32> to vector<64x128xbf16>
    %7 = arith.truncf %3 : vector<32x128xf32> to vector<32x128xbf16>
    %cst = arith.constant dense<0.000000e+00> : vector<64x32xf32>
    %8 = tpu.matmul %6, %7, %cst {dimension_numbers = #tpu.dot_dimension_numbers<[1], [1], [0], [0], [0, 0, 1, 0], [], []>} : vector<64x128xbf16>, vector<32x128xbf16>, vector<64x32xf32> -> vector<64x32xf32>
    %cst_8 = arith.constant 11.3137083 : f32
    %9 = vector.broadcast %cst_8 : f32 to vector<64x32xf32>
    %10 = arith.mulf %8, %9 : vector<64x32xf32>
    %cst_9 = arith.constant dense<0xFF800000> : vector<64xf32>
    %11 = vector.multi_reduction <maximumf>, %10, %cst_9 [1] : vector<64x32xf32> to vector<64xf32>
    %12 = vector.shape_cast %11 : vector<64xf32> to vector<64x1xf32>
    %13 = vector.broadcast %12 : vector<64x1xf32> to vector<64x32xf32>
    %14 = arith.subf %10, %13 : vector<64x32xf32>
    %15 = math.exp %14 : vector<64x32xf32>
    %cst_10 = arith.constant dense<0.000000e+00> : vector<64xf32>
    %16 = vector.multi_reduction <add>, %15, %cst_10 [1] : vector<64x32xf32> to vector<64xf32>
    %17 = vector.shape_cast %16 : vector<64xf32> to vector<64x1xf32>
    %cst_11 = arith.constant 0.699999988 : f32
    %18 = vector.broadcast %cst_11 : f32 to vector<64x1xf32>
    %19 = arith.mulf %17, %18 : vector<64x1xf32>
    %20 = tpu.reciprocal %19 {approx = true} : vector<64x1xf32> -> vector<64x1xf32>
    %21 = tpu.iota {dimensions = array<i32: 0>} : vector<64x32xi32>
    %22 = tpu.iota {dimensions = array<i32: 1>} : vector<64x32xi32>
    %c32_i32 = arith.constant 32 : i32
    %23 = vector.broadcast %c32_i32 : i32 to vector<64x32xi32>
    %24 = arith.muli %21, %23 : vector<64x32xi32>
    %25 = arith.addi %24, %22 : vector<64x32xi32>
    %c0_12 = arith.constant 0 : index
    %26 = memref.load %arg1[%c0_12] : memref<1xi32, #tpu.memory_space<smem>>
    %c-1640531535_i32 = arith.constant -1640531535 : i32
    %27 = arith.muli %26, %c-1640531535_i32 : i32
    %c1_i32 = arith.constant 1 : i32
    %28 = arith.addi %arg0, %c1_i32 : i32
    %c-2048144777_i32 = arith.constant -2048144777 : i32
    %29 = arith.muli %28, %c-2048144777_i32 : i32
    %30 = arith.addi %27, %29 : i32
    %c668265263_i32 = arith.constant 668265263 : i32
    %31 = vector.broadcast %c668265263_i32 : i32 to vector<64x32xi32>
    %32 = arith.muli %25, %31 : vector<64x32xi32>
    %33 = vector.broadcast %30 : i32 to vector<64x32xi32>
    %34 = arith.addi %32, %33 : vector<64x32xi32>
    %c16_i32 = arith.constant 16 : i32
    %35 = vector.broadcast %c16_i32 : i32 to vector<64x32xi32>
    %36 = arith.shrui %34, %35 : vector<64x32xi32>
    %37 = arith.xori %34, %36 : vector<64x32xi32>
    %c-2048144789_i32 = arith.constant -2048144789 : i32
    %38 = vector.broadcast %c-2048144789_i32 : i32 to vector<64x32xi32>
    %39 = arith.muli %37, %38 : vector<64x32xi32>
    %c13_i32 = arith.constant 13 : i32
    %40 = vector.broadcast %c13_i32 : i32 to vector<64x32xi32>
    %41 = arith.shrui %39, %40 : vector<64x32xi32>
    %42 = arith.xori %39, %41 : vector<64x32xi32>
    %c-1028477387_i32 = arith.constant -1028477387 : i32
    %43 = vector.broadcast %c-1028477387_i32 : i32 to vector<64x32xi32>
    %44 = arith.muli %42, %43 : vector<64x32xi32>
    %c16_i32_13 = arith.constant 16 : i32
    %45 = vector.broadcast %c16_i32_13 : i32 to vector<64x32xi32>
    %46 = arith.shrui %44, %45 : vector<64x32xi32>
    %47 = arith.xori %44, %46 : vector<64x32xi32>
    %c8388607_i32 = arith.constant 8388607 : i32
    %48 = vector.broadcast %c8388607_i32 : i32 to vector<64x32xi32>
    %49 = arith.andi %47, %48 : vector<64x32xi32>
    %c2516582_i32 = arith.constant 2516582 : i32
    %50 = vector.broadcast %c2516582_i32 : i32 to vector<64x32xi32>
    %51 = arith.cmpi sge, %49, %50 : vector<64x32xi32>
    %52 = vector.broadcast %20 : vector<64x1xf32> to vector<64x32xf32>
    %53 = arith.mulf %15, %52 : vector<64x32xf32>
    %cst_14 = arith.constant 0.000000e+00 : f32
    %54 = vector.broadcast %cst_14 : f32 to vector<64x32xf32>
    %55 = arith.select %51, %53, %54 : vector<64x32xi1>, vector<64x32xf32>
    %56 = arith.truncf %55 : vector<64x32xf32> to vector<64x32xbf16>
    %57 = arith.truncf %5 : vector<32x256xf32> to vector<32x256xbf16>
    %cst_15 = arith.constant dense<0.000000e+00> : vector<64x256xf32>
    %58 = tpu.matmul %56, %57, %cst_15 {dimension_numbers = #tpu.dot_dimension_numbers<[1], [0], [0], [1], [0, 0, 1, 1], [], []>} : vector<64x32xbf16>, vector<32x256xbf16>, vector<64x256xf32> -> vector<64x256xf32>
    %c0_16 = arith.constant 0 : index
    %c0_17 = arith.constant 0 : index
    %c0_18 = arith.constant 0 : index
    %59 = vector.load %arg5[%c0_16, %c0_17, %c0_18] : memref<1x64x256xf32, #tpu.memory_space<vmem>>, vector<1x64x256xf32>
    %60 = vector.shape_cast %59 : vector<1x64x256xf32> to vector<64x256xf32>
    %61 = vector.shape_cast %58 : vector<64x256xf32> to vector<1x64x256xf32>
    tpu.vector_store %arg5[%c0_16, %c0_17, %c0_18], %61 {strides = array<i32>} : memref<1x64x256xf32, #tpu.memory_space<vmem>>, vector<1x64x256xf32>,
    return
  }
  func.func @transform_0(%arg0: i32, %arg1: memref<1xi32, #tpu.memory_space<smem>>) -> (i32, i32, i32) {
    %c0_i32 = arith.constant 0 : i32
    %c0_i32_0 = arith.constant 0 : i32
    %c0_i32_1 = arith.constant 0 : i32
    return %arg0, %c0_i32, %c0_i32_0 : i32, i32, i32
  }
  func.func @transform_1(%arg0: i32, %arg1: memref<1xi32, #tpu.memory_space<smem>>) -> (i32, i32, i32) {
    %c0_i32 = arith.constant 0 : i32
    %c0_i32_0 = arith.constant 0 : i32
    %c0_i32_1 = arith.constant 0 : i32
    return %arg0, %c0_i32, %c0_i32_0 : i32, i32, i32
  }
  func.func @transform_2(%arg0: i32, %arg1: memref<1xi32, #tpu.memory_space<smem>>) -> (i32, i32, i32) {
    %c0_i32 = arith.constant 0 : i32
    %c0_i32_0 = arith.constant 0 : i32
    %c0_i32_1 = arith.constant 0 : i32
    return %arg0, %c0_i32, %c0_i32_0 : i32, i32, i32
  }
  func.func @transform_3(%arg0: i32, %arg1: memref<1xi32, #tpu.memory_space<smem>>) -> (i32, i32, i32) {
    %c0_i32 = arith.constant 0 : i32
    %c0_i32_0 = arith.constant 0 : i32
    %c0_i32_1 = arith.constant 0 : i32
    return %arg0, %c0_i32, %c0_i32_0 : i32, i32, i32
  }
}

</mosaic_0001>

<llo_original>
// kernel: tpu_custom_call.1
$region0: #{tpu_custom_call.1}
  #allocation0 [shape = 'u32[]', space=smem, size = 0x4, offset = 0x4, fixed_abs, tag = 'smem constant byte address 0x4 - core index']
  #allocation1 [shape = 'u32[144,128]{1,0:T(1,128)}', space=vmem, size = 0x12000, scoped, tag = 'internal scratch']
  #allocation2 [shape = 's32[1]{0}', space=sflag, size = 0x4, scoped, tag = 'scoped memory for tpu_custom_call.1']
  #allocation3 [shape = 's32[1]{0:T(128)S(6)}', space=smem, size = 0x200, scoped, tag = 'prefetched SMEM operand 0']
  %s0 = inlined_call_operand.<no memory space> [shape: s32[1], index: 0, kind: input, shape index: {}]
  %s1 = inlined_call_operand.hbm [shape: f32[2,64,128], index: 1, kind: input, shape index: {}]
  %s2 = inlined_call_operand.hbm [shape: f32[2,32,128], index: 2, kind: input, shape index: {}]
  %s3 = inlined_call_operand.hbm [shape: f32[2,32,256], index: 3, kind: input, shape index: {}]
  %s4 = inlined_call_operand.hbm [shape: f32[2,64,256], index: 4, kind: output, shape index: {}]
  %s5 = sld [smem:[#allocation0]]
  $region57: #{tpu_custom_call.1} parent=0
    _
  %s7 = ssub.s32 1, %s5
  %s8 = scalar_select 0, %s7, %s5
  %9 = sst [smem:[#allocation3]] %s0
  $region1: #{tpu_custom_call.1} parent=0
    #allocation4 [shape = 'u8[65536]{0}', space=vmem, size = 0x10000, scoped, tag = 'input window, operand 1']
    #allocation5 [shape = 's32[2]{0}', space=sflag, size = 0x8, scoped, tag = 'scoped memory for tpu_custom_call.1']
    #allocation6 [shape = 's32[2]{0}', space=sflag, size = 0x8, scoped, tag = 'scoped memory for tpu_custom_call.1']
    #allocation7 [shape = 'u8[32768]{0}', space=vmem, size = 0x8000, scoped, tag = 'input window, operand 2']
    #allocation8 [shape = 's32[2]{0}', space=sflag, size = 0x8, scoped, tag = 'scoped memory for tpu_custom_call.1']
    #allocation9 [shape = 'u8[65536]{0}', space=vmem, size = 0x10000, scoped, tag = 'input window, operand 3']
    #allocation10 [shape = 'u8[131072]{0}', space=vmem, size = 0x20000, scoped, tag = 'output window, operand 0']
    %10 = vsyncpa [#allocation5], 0
    %s11 = scalar_lea.sflag [#allocation5], 1
    %12 = vsyncpa %s11, 0
    %13 = vsyncpa [#allocation8], 0
    %s14 = scalar_lea.sflag [#allocation8], 1
    %15 = vsyncpa %s14, 0
    %16 = vsyncpa [#allocation6], 0
    %s17 = scalar_lea.sflag [#allocation6], 1
    %18 = vsyncpa %s17, 0
    loop: start=0, step=1, limit=4
    $region2: #{tpu_custom_call.1} parent=1 // loop_pre_header
      _
    $region3: #{tpu_custom_call.1} parent=1 // loop_header
      %s20 = sphi 0, %s24
      %p21 = scmp.ge.s32.totalorder %s20, 4
      %s30 = sphi 0, %s32
      %s33 = sphi 0, %s30
      %s34 = sphi 0, %s33
      %s50 = sphi 0, %s34
      %s56 = sphi 0, %s58
      %s59 = sphi 0, %s56
      %s60 = sphi 0, %s59
      %s76 = sphi 0, %s60
      %s82 = sphi 0, %s84
      %s85 = sphi 0, %s82
      %s86 = sphi 0, %s85
      %s102 = sphi 0, %s86
      %s108 = sphi 0, %s110
      %s111 = sphi 0, %s108
      %s112 = sphi 0, %s111
      %s128 = sphi 0, %s112
    $region4: #{tpu_custom_call.1} parent=1 // loop_header_branch
      %23 = sbr.rel (%p21) target = $region8
    $region5: #{tpu_custom_call.1} parent=1 // loop_body
      %s25 = ssub.s32 %s20, 1
      %s26 = ssub.s32 %s20, 2
      %s27 = sadd.s32 %s20, 1
      %s28 = ssub.s32 %s20, %s27
      %p29 = scmp.eq.s32.totalorder %s28, 0
      %s31 = sadd.s32 %s30, 1
      %s32 = scalar_select %p29, %s30, %s31
      %p35 = pneg %p29
      %p36 = scmp.eq.s32.totalorder %s20, 1
      %p37 = por %p35, %p36
      %p38 = scmp.ne.s32.totalorder %s30, %s33
      %p39 = scmp.eq.s32.totalorder %s20, 0
      %p40 = por %p38, %p39
      %p41 = scmp.ne.s32.totalorder %s30, %s33
      %p42 = scmp.eq.s32.totalorder %s25, 1
      %p43 = por %p41, %p42
      %p44 = scmp.ne.s32.totalorder %s33, %s34
      %p45 = scmp.eq.s32.totalorder %s25, 0
      %p46 = por %p44, %p45
      %p47 = scmp.ne.s32.totalorder %s33, %s34
      %p48 = scmp.eq.s32.totalorder %s26, 1
      %p49 = por %p47, %p48
      %p51 = scmp.ne.s32.totalorder %s34, %s50
      %p52 = scmp.eq.s32.totalorder %s26, 0
      %p53 = por %p51, %p52
      %s54 = ssub.s32 %s20, %s27
      %p55 = scmp.eq.s32.totalorder %s54, 0
      %s57 = sadd.s32 %s56, 1
      %s58 = scalar_select %p55, %s56, %s57
      %p61 = pneg %p55
      %p62 = scmp.eq.s32.totalorder %s20, 1
      %p63 = por %p61, %p62
      %p64 = scmp.ne.s32.totalorder %s56, %s59
      %p65 = scmp.eq.s32.totalorder %s20, 0
      %p66 = por %p64, %p65
      %p67 = scmp.ne.s32.totalorder %s56, %s59
      %p68 = scmp.eq.s32.totalorder %s25, 1
      %p69 = por %p67, %p68
      %p70 = scmp.ne.s32.totalorder %s59, %s60
      %p71 = scmp.eq.s32.totalorder %s25, 0
      %p72 = por %p70, %p71
      %p73 = scmp.ne.s32.totalorder %s59, %s60
      %p74 = scmp.eq.s32.totalorder %s26, 1
      %p75 = por %p73, %p74
      %p77 = scmp.ne.s32.totalorder %s60, %s76
      %p78 = scmp.eq.s32.totalorder %s26, 0
      %p79 = por %p77, %p78
      %s80 = ssub.s32 %s20, %s27
      %p81 = scmp.eq.s32.totalorder %s80, 0
      %s83 = sadd.s32 %s82, 1
      %s84 = scalar_select %p81, %s82, %s83
      %p87 = pneg %p81
      %p88 = scmp.eq.s32.totalorder %s20, 1
      %p89 = por %p87, %p88
      %p90 = scmp.ne.s32.totalorder %s82, %s85
      %p91 = scmp.eq.s32.totalorder %s20, 0
      %p92 = por %p90, %p91
      %p93 = scmp.ne.s32.totalorder %s82, %s85
      %p94 = scmp.eq.s32.totalorder %s25, 1
      %p95 = por %p93, %p94
      %p96 = scmp.ne.s32.totalorder %s85, %s86
      %p97 = scmp.eq.s32.totalorder %s25, 0
      %p98 = por %p96, %p97
      %p99 = scmp.ne.s32.totalorder %s85, %s86
      %p100 = scmp.eq.s32.totalorder %s26, 1
      %p101 = por %p99, %p100
      %p103 = scmp.ne.s32.totalorder %s86, %s102
      %p104 = scmp.eq.s32.totalorder %s26, 0
      %p105 = por %p103, %p104
      %s106 = ssub.s32 %s20, %s27
      %p107 = scmp.eq.s32.totalorder %s106, 0
      %s109 = sadd.s32 %s108, 1
      %s110 = scalar_select %p107, %s108, %s109
      %p113 = pneg %p107
      %p114 = scmp.eq.s32.totalorder %s20, 1
      %p115 = por %p113, %p114
      %p116 = scmp.ne.s32.totalorder %s108, %s111
      %p117 = scmp.eq.s32.totalorder %s20, 0
      %p118 = por %p116, %p117
      %p119 = scmp.ne.s32.totalorder %s108, %s111
      %p120 = scmp.eq.s32.totalorder %s25, 1
      %p121 = por %p119, %p120
      %p122 = scmp.ne.s32.totalorder %s111, %s112
      %p123 = scmp.eq.s32.totalorder %s25, 0
      %p124 = por %p122, %p123
      %p125 = scmp.ne.s32.totalorder %s111, %s112
      %p126 = scmp.eq.s32.totalorder %s26, 1
      %p127 = por %p125, %p126
      %p129 = scmp.ne.s32.totalorder %s112, %s128
      %p130 = scmp.eq.s32.totalorder %s26, 0
      %p131 = por %p129, %p130
      %p132 = scmp.le.s32.totalorder 1, %s20
      %p133 = scmp.lt.s32.totalorder %s20, 3
      %p134 = pnand %p132, %p133
      %p135 = pneg %p134
      // Predicated region
      $region9: #{tpu_custom_call.1} parent=5 // pred_check
        _
      $region10: #{tpu_custom_call.1} parent=5 // pred_check_branch
        %137 = sbr.rel (%p134) target = $region12
      $region11: #{tpu_custom_call.1} parent=5 // pred_region
        %s138 = ssub.s32 %s20, 1
      $region12: #{tpu_custom_call.1} parent=5 // pred_fallthru
        _
      %p139 = scmp.lt.s32.totalorder %s20, 2
      // Predicated region
      $region13: #{tpu_custom_call.1} parent=5 // pred_check
        %p140 = pneg %p139
      $region14: #{tpu_custom_call.1} parent=5 // pred_check_branch
        %142 = sbr.rel (%p140) target = $region16
      $region15: #{tpu_custom_call.1} parent=5 // pred_region
        // Predicated region
        $region17: #{tpu_custom_call.1} parent=15 // pred_check
          %p143 = pneg %p40
        $region18: #{tpu_custom_call.1} parent=15 // pred_check_branch
          %145 = sbr.rel (%p143) target = $region20
        $region19: #{tpu_custom_call.1} parent=15 // pred_region
          %s146 = sand.u32 %s30, 1
          %s147 = scalar_lea.sflag [#allocation5], %s146
          %s148 = sand.u32 %s30, 1
          %s149 = smul.addr %s148, 64
          %s150 = scalar_lea.vmem [#allocation4], %s149
          %s152 = ssub.s32 1024, 1024
          %153 = vsyncadd %s147, %s152
          %s154 = smul.addr %s20, 8
          %s155 = smul.addr %s154, 128
          %s156 = scalar_lea.hbm %s1, %s155
          %s157 = sshll.u32 %s150, 4
          %s158 = int_to_ptr.vmem [resolvable:$true] %s157
          %163 = dma.hbm_to_vmem [thread:$0]  %s156, 1024, %s158, %s147, 128, 128, 8
        $region20: #{tpu_custom_call.1} parent=15 // pred_fallthru
          _
        // Predicated region
        $region21: #{tpu_custom_call.1} parent=15 // pred_check
          %p164 = pneg %p66
        $region22: #{tpu_custom_call.1} parent=15 // pred_check_branch
          %166 = sbr.rel (%p164) target = $region24
        $region23: #{tpu_custom_call.1} parent=15 // pred_region
          %s167 = sand.u32 %s20, 1
          %s168 = scalar_lea.sflag [#allocation8], %s167
          %s169 = sand.u32 %s56, 1
          %s170 = smul.addr %s169, 32
          %s171 = scalar_lea.vmem [#allocation7], %s170
          %s173 = ssub.s32 512, 512
          %174 = vsyncadd %s168, %s173
          %s175 = smul.addr %s20, 4
          %s176 = smul.addr %s175, 128
          %s177 = scalar_lea.hbm %s2, %s176
          %s178 = sshll.u32 %s171, 4
          %s179 = int_to_ptr.vmem [resolvable:$true] %s178
          %184 = dma.hbm_to_vmem [thread:$0]  %s177, 512, %s179, %s168, 128, 128, 8
        $region24: #{tpu_custom_call.1} parent=15 // pred_fallthru
          _
        // Predicated region
        $region25: #{tpu_custom_call.1} parent=15 // pred_check
          %p185 = pneg %p92
        $region26: #{tpu_custom_call.1} parent=15 // pred_check_branch
          %187 = sbr.rel (%p185) target = $region28
        $region27: #{tpu_custom_call.1} parent=15 // pred_region
          %s188 = sand.u32 %s20, 1
          %s189 = scalar_lea.sflag [#allocation8], %s188
          %s190 = sand.u32 %s82, 1
          %s191 = smul.addr %s190, 64
          %s192 = scalar_lea.vmem [#allocation9], %s191
          %s194 = ssub.s32 1024, 1024
          %195 = vsyncadd %s189, %s194
          %s196 = smul.addr %s20, 8
          %s197 = smul.addr %s196, 128
          %s198 = scalar_lea.hbm %s3, %s197
          %s199 = sshll.u32 %s192, 4
          %s200 = int_to_ptr.vmem [resolvable:$true] %s199
          %205 = dma.hbm_to_vmem [thread:$0]  %s198, 1024, %s200, %s189, 256, 256, 16
        $region28: #{tpu_custom_call.1} parent=15 // pred_fallthru
          _
      $region16: #{tpu_custom_call.1} parent=5 // pred_fallthru
        _
      %p206 = scmp.le.s32.totalorder 1, %s20
      %p207 = scmp.lt.s32.totalorder %s20, 3
      %p208 = pnand %p206, %p207
      %p209 = pneg %p208
      // Predicated region
      $region29: #{tpu_custom_call.1} parent=5 // pred_check
        _
      $region30: #{tpu_custom_call.1} parent=5 // pred_check_branch
        %211 = sbr.rel (%p208) target = $region32
      $region31: #{tpu_custom_call.1} parent=5 // pred_region
        %s212 = ssub.s32 %s20, 1
        %s213 = sand.u32 %s33, 1
        %s214 = scalar_lea.sflag [#allocation5], %s213
        %s215 = sand.u32 %s33, 1
        %s216 = smul.addr %s215, 64
        %s217 = scalar_lea.vmem [#allocation4], %s216
        // Predicated region
        $region33: #{tpu_custom_call.1} parent=31 // pred_check
          %p218 = pneg %p46
        $region34: #{tpu_custom_call.1} parent=31 // pred_check_branch
          %220 = sbr.rel (%p218) target = $region36
        $region35: #{tpu_custom_call.1} parent=31 // pred_region
          %221 = dma.done %s214, 1024
        $region36: #{tpu_custom_call.1} parent=31 // pred_fallthru
          _
        %s222 = sand.u32 %s25, 1
        %s223 = scalar_lea.sflag [#allocation8], %s222
        %s224 = sand.u32 %s59, 1
        %s225 = smul.addr %s224, 32
        %s226 = scalar_lea.vmem [#allocation7], %s225
        // Predicated region
        $region37: #{tpu_custom_call.1} parent=31 // pred_check
          %p227 = pneg %p72
        $region38: #{tpu_custom_call.1} parent=31 // pred_check_branch
          %229 = sbr.rel (%p227) target = $region40
        $region39: #{tpu_custom_call.1} parent=31 // pred_region
          %230 = dma.done %s223, 512
        $region40: #{tpu_custom_call.1} parent=31 // pred_fallthru
          _
        %s231 = sand.u32 %s25, 1
        %s232 = scalar_lea.sflag [#allocation8], %s231
        %s233 = sand.u32 %s85, 1
        %s234 = smul.addr %s233, 64
        %s235 = scalar_lea.vmem [#allocation9], %s234
        // Predicated region
        $region41: #{tpu_custom_call.1} parent=31 // pred_check
          %p236 = pneg %p98
        $region42: #{tpu_custom_call.1} parent=31 // pred_check_branch
          %238 = sbr.rel (%p236) target = $region44
        $region43: #{tpu_custom_call.1} parent=31 // pred_region
          %239 = dma.done %s232, 1024
        $region44: #{tpu_custom_call.1} parent=31 // pred_fallthru
          _
        %s240 = sand.u32 %s33, 1
        %s241 = scalar_lea.sflag [#allocation5], %s240
        %s242 = sand.u32 %s33, 1
        %s243 = smul.addr %s242, 64
        %s244 = scalar_lea.vmem [#allocation4], %s243
        %p245 = pneg %p46
        %p246 = pneg %p43
        %s247 = sand.u32 %s25, 1
        %s248 = scalar_lea.sflag [#allocation8], %s247
        %s249 = sand.u32 %s59, 1
        %s250 = smul.addr %s249, 32
        %s251 = scalar_lea.vmem [#allocation7], %s250
        %p252 = pneg %p72
        %p253 = pneg %p69
        %s254 = sand.u32 %s25, 1
        %s255 = scalar_lea.sflag [#allocation8], %s254
        %s256 = sand.u32 %s85, 1
        %s257 = smul.addr %s256, 64
        %s258 = scalar_lea.vmem [#allocation9], %s257
        %p259 = pneg %p98
        %p260 = pneg %p95
        %p261 = pneg %p124
        %p262 = pneg %p121
        %s263 = sand.u32 %s111, 1
        %s264 = scalar_lea.sflag [#allocation6], %s263
        %s265 = sand.u32 %s111, 1
        %s266 = smul.addr %s265, 128
        %s267 = scalar_lea.vmem [#allocation10], %s266
        %v269 = vld [vmem:[%s217] sm:$0xff]
        %v270 = vld [vmem:[%s217 + $0x8] sm:$0xff]
        %v271 = vld [vmem:[%s217 + $0x10] sm:$0xff]
        %v272 = vld [vmem:[%s217 + $0x18] sm:$0xff]
        %v273 = vld [vmem:[%s217 + $0x20] sm:$0xff]
        %v274 = vld [vmem:[%s217 + $0x28] sm:$0xff]
        %v275 = vld [vmem:[%s217 + $0x30] sm:$0xff]
        %v276 = vld [vmem:[%s217 + $0x38] sm:$0xff]
        %v277 = vld [vmem:[%s226] sm:$0xff]
        %v278 = vld [vmem:[%s226 + $0x8] sm:$0xff]
        %v279 = vld [vmem:[%s226 + $0x10] sm:$0xff]
        %v280 = vld [vmem:[%s226 + $0x18] sm:$0xff]
        %v281 = vld [vmem:[%s235] sm:$0xff]
        %v282 = vld [vmem:[%s235 + $0x8] sm:$0xff]
        %v283 = vld [vmem:[%s235 + $0x10] sm:$0xff]
        %v284 = vld [vmem:[%s235 + $0x18] sm:$0xff]
        %v285 = vld [vmem:[%s235 + $0x20] sm:$0xff]
        %v286 = vld [vmem:[%s235 + $0x28] sm:$0xff]
        %v287 = vld [vmem:[%s235 + $0x30] sm:$0xff]
        %v288 = vld [vmem:[%s235 + $0x38] sm:$0xff]
        %v289 = vpack.c.bf16 %v270, %v269
        %v290 = vpack.c.bf16 %v272, %v271
        %v291 = vpack.c.bf16 %v274, %v273
        %v292 = vpack.c.bf16 %v276, %v275
        %v293 = vpack.c.bf16 %v278, %v277
        %v294 = vpack.c.bf16 %v280, %v279
        %295 = vmatprep.subr.bf16.mxu0 0
        %296 = vmatpush1.bf16.xpose.msra.mxu0 %v293
        %297 = vmatprep.subr.bf16.mxu0 0
        %298 = vmatpush1.bf16.xpose.msra.mxu0 %v294
        %299 = vmatprep.subr.bf16.mxu0 0
        %300 = vmatpush1.bf16.xpose.msra.mxu0 0
        %301 = vmatprep.subr.bf16.mxu0 0
        %302 = vmatpush1.bf16.xpose.msra.mxu0 0
        %303 = vmatprep.subr.bf16.mxu0 0
        %304 = vmatpush1.bf16.xpose.msra.mxu0 0
        %305 = vmatprep.subr.bf16.mxu0 0
        %306 = vmatpush1.bf16.xpose.msra.mxu0 0
        %307 = vmatprep.subr.bf16.mxu0 0
        %308 = vmatpush1.bf16.xpose.msra.mxu0 0
        %309 = vmatprep.subr.bf16.mxu0 0
        %310 = vmatpush1.bf16.xpose.msra.mxu0 0
        %311 = vmatprep.subr.bf16.mxu0 0
        %312 = vmatpush1.bf16.xpose.msra.mxu0 0
        %313 = vmatprep.subr.bf16.mxu0 0
        %314 = vmatpush1.bf16.xpose.msra.mxu0 0
        %315 = vmatprep.subr.bf16.mxu0 0
        %316 = vmatpush1.bf16.xpose.msra.mxu0 0
        %317 = vmatprep.subr.bf16.mxu0 0
        %318 = vmatpush1.bf16.xpose.msra.mxu0 0
        %319 = vmatprep.subr.bf16.mxu0 0
        %320 = vmatpush1.bf16.xpose.msra.mxu0 0
        %321 = vmatprep.subr.bf16.mxu0 0
        %322 = vmatpush1.bf16.xpose.msra.mxu0 0
        %323 = vmatprep.subr.bf16.mxu0 0
        %324 = vmatpush1.bf16.xpose.msra.mxu0 0
        %325 = vmatprep.subr.bf16.mxu0 0
        %326 = vmatpush1.bf16.xpose.msra.mxu0 0
        %327 = vmatprep.mubr.bf16.mxu0 0
        %328 = vmatmul.mubr.bf16.gmra.mrb[0].mxu0 %v289
        %v329 = vpop.f32.mrb[0].mxu0
        %v330 = vadd.f32 0.0, %v329
        %v331 = vpop.f32.mrb[0].mxu0
        %v332 = vpop.f32.mrb[0].mxu0
        %v333 = vadd.f32 0.0, %v332
        %v334 = vpop.f32.mrb[0].mxu0
        %335 = vmatprep.mubr.bf16.mxu0 0
        %336 = vmatmul.mubr.bf16.gmra.mrb[0].mxu0 %v290
        %v337 = vpop.f32.mrb[0].mxu0
        %v338 = vadd.f32 0.0, %v337
        %v339 = vpop.f32.mrb[0].mxu0
        %v340 = vpop.f32.mrb[0].mxu0
        %v341 = vadd.f32 0.0, %v340
        %v342 = vpop.f32.mrb[0].mxu0
        %343 = vmatprep.mubr.bf16.mxu0 0
        %344 = vmatmul.mubr.bf16.gmra.mrb[0].mxu0 %v291
        %v345 = vpop.f32.mrb[0].mxu0
        %v346 = vadd.f32 0.0, %v345
        %v347 = vpop.f32.mrb[0].mxu0
        %v348 = vpop.f32.mrb[0].mxu0
        %v349 = vadd.f32 0.0, %v348
        %v350 = vpop.f32.mrb[0].mxu0
        %351 = vmatprep.mubr.bf16.mxu0 0
        %352 = vmatmul.mubr.bf16.gmra.mrb[0].mxu0 %v292
        %v353 = vpop.f32.mrb[0].mxu0
        %v354 = vadd.f32 0.0, %v353
        %v355 = vpop.f32.mrb[0].mxu0
        %v356 = vpop.f32.mrb[0].mxu0
        %v357 = vadd.f32 0.0, %v356
        %v358 = vpop.f32.mrb[0].mxu0
        %359 = vdwg.mxu0
        %v360 = vmul.f32 %v330, 11.313708
        %v361 = vmul.f32 %v333, 11.313708
        %v362 = vmul.f32 %v338, 11.313708
        %v363 = vmul.f32 %v341, 11.313708
        %v364 = vmul.f32 %v346, 11.313708
        %v365 = vmul.f32 %v349, 11.313708
        %v366 = vmul.f32 %v354, 11.313708
        %v367 = vmul.f32 %v357, 11.313708
        %vm368 = vcmask 261120
        %v369 = vsel %vm368, %v360, -inf
        %370 = vmax.xlane.f32.xlu0 %v369
        %v371 = vpop.xlane.xlu0 %370
        %v372 = vsel %vm368, %v361, -inf
        %373 = vmax.xlane.f32.xlu0 %v372
        %v374 = vpop.xlane.xlu0 %373
        %v375 = vsel %vm368, %v362, -inf
        %376 = vmax.xlane.f32.xlu0 %v375
        %v377 = vpop.xlane.xlu0 %376
        %v378 = vsel %vm368, %v363, -inf
        %379 = vmax.xlane.f32.xlu0 %v378
        %v380 = vpop.xlane.xlu0 %379
        %v381 = vsel %vm368, %v364, -inf
        %382 = vmax.xlane.f32.xlu0 %v381
        %v383 = vpop.xlane.xlu0 %382
        %v384 = vsel %vm368, %v365, -inf
        %385 = vmax.xlane.f32.xlu0 %v384
        %v386 = vpop.xlane.xlu0 %385
        %v387 = vsel %vm368, %v366, -inf
        %388 = vmax.xlane.f32.xlu0 %v387
        %v389 = vpop.xlane.xlu0 %388
        %v390 = vsel %vm368, %v367, -inf
        %391 = vmax.xlane.f32.xlu0 %v390
        %v392 = vpop.xlane.xlu0 %391
        %v393 = vsub.f32 %v360, %v371
        %v394 = vsub.f32 %v361, %v374
        %v395 = vsub.f32 %v362, %v377
        %v396 = vsub.f32 %v363, %v380
        %v397 = vsub.f32 %v364, %v383
        %v398 = vsub.f32 %v365, %v386
        %v399 = vsub.f32 %v366, %v389
        %v400 = vsub.f32 %v367, %v392
        %v401 = vmul.f32 %v393, 1.442695
        %v402 = vpow.pop %v401
        %v403 = vmul.f32 %v394, 1.442695
        %v404 = vpow.pop %v403
        %v405 = vmul.f32 %v395, 1.442695
        %v406 = vpow.pop %v405
        %v407 = vmul.f32 %v396, 1.442695
        %v408 = vpow.pop %v407
        %v409 = vmul.f32 %v397, 1.442695
        %v410 = vpow.pop %v409
        %v411 = vmul.f32 %v398, 1.442695
        %v412 = vpow.pop %v411
        %v413 = vmul.f32 %v399, 1.442695
        %v414 = vpow.pop %v413
        %v415 = vmul.f32 %v400, 1.442695
        %v416 = vpow.pop %v415
        %v417 = vsel %vm368, %v402, 0.0
        %418 = vadd.xlane.f32.xlu0 %v417
        %v419 = vpop.xlane.xlu0 %418
        %v420 = vsel %vm368, %v404, 0.0
        %421 = vadd.xlane.f32.xlu0 %v420
        %v422 = vpop.xlane.xlu0 %421
        %v423 = vsel %vm368, %v406, 0.0
        %424 = vadd.xlane.f32.xlu0 %v423
        %v425 = vpop.xlane.xlu0 %424
        %v426 = vsel %vm368, %v408, 0.0
        %427 = vadd.xlane.f32.xlu0 %v426
        %v428 = vpop.xlane.xlu0 %427
        %v429 = vsel %vm368, %v410, 0.0
        %430 = vadd.xlane.f32.xlu0 %v429
        %v431 = vpop.xlane.xlu0 %430
        %v432 = vsel %vm368, %v412, 0.0
        %433 = vadd.xlane.f32.xlu0 %v432
        %v434 = vpop.xlane.xlu0 %433
        %v435 = vsel %vm368, %v414, 0.0
        %436 = vadd.xlane.f32.xlu0 %v435
        %v437 = vpop.xlane.xlu0 %436
        %v438 = vsel %vm368, %v416, 0.0
        %439 = vadd.xlane.f32.xlu0 %v438
        %v440 = vpop.xlane.xlu0 %439
        %v441 = vmul.f32 %v419, 0.7
        %v442 = vmul.f32 %v422, 0.7
        %v443 = vmul.f32 %v425, 0.7
        %v444 = vmul.f32 %v428, 0.7
        %v445 = vmul.f32 %v431, 0.7
        %v446 = vmul.f32 %v434, 0.7
        %v447 = vmul.f32 %v437, 0.7
        %v448 = vmul.f32 %v440, 0.7
        %v449 = vrcp.pop %v441
        %v450 = vrcp.pop %v442
        %v451 = vrcp.pop %v443
        %v452 = vrcp.pop %v444
        %v453 = vrcp.pop %v445
        %v454 = vrcp.pop %v446
        %v455 = vrcp.pop %v447
        %v456 = vrcp.pop %v448
        %v457 = vlaneseq
        %v458 = vshrl.u32 %v457, 7
        %v459 = vadd.s32 %v458, 8
        %v460 = vadd.s32 %v458, 16
        %v461 = vadd.s32 %v458, 24
        %v462 = vadd.s32 %v458, 32
        %v463 = vadd.s32 %v458, 40
        %v464 = vadd.s32 %v458, 48
        %v465 = vadd.s32 %v458, 56
        %v466 = vlaneseq
        %v467 = vand.u32 %v466, 127
        %v468 = vmul.u32 %v458, 32
        %v469 = vmul.u32 %v459, 32
        %v470 = vmul.u32 %v460, 32
        %v471 = vmul.u32 %v461, 32
        %v472 = vmul.u32 %v462, 32
        %v473 = vmul.u32 %v463, 32
        %v474 = vmul.u32 %v464, 32
        %v475 = vmul.u32 %v465, 32
        %v476 = vadd.s32 %v468, %v467
        %v477 = vadd.s32 %v469, %v467
        %v478 = vadd.s32 %v470, %v467
        %v479 = vadd.s32 %v471, %v467
        %v480 = vadd.s32 %v472, %v467
        %v481 = vadd.s32 %v473, %v467
        %v482 = vadd.s32 %v474, %v467
        %v483 = vadd.s32 %v475, %v467
        %s484 = sld [smem:[#allocation3]]
        %s485 = smul.u32 %s484, 2654435761
        %s486 = sadd.s32 %s25, 1
        %s487 = smul.u32 %s486, 2246822519
        %s488 = sadd.s32 %s485, %s487
        %v489 = vmul.u32 %v476, 668265263
        %v490 = vmul.u32 %v477, 668265263
        %v491 = vmul.u32 %v478, 668265263
        %v492 = vmul.u32 %v479, 668265263
        %v493 = vmul.u32 %v480, 668265263
        %v494 = vmul.u32 %v481, 668265263
        %v495 = vmul.u32 %v482, 668265263
        %v496 = vmul.u32 %v483, 668265263
        %v497 = vstv %s488
        %v498 = vadd.s32 %v489, %v497
        %v499 = vadd.s32 %v490, %v497
        %v500 = vadd.s32 %v491, %v497
        %v501 = vadd.s32 %v492, %v497
        %v502 = vadd.s32 %v493, %v497
        %v503 = vadd.s32 %v494, %v497
        %v504 = vadd.s32 %v495, %v497
        %v505 = vadd.s32 %v496, %v497
        %v506 = vshrl.u32 %v498, 16
        %v507 = vshrl.u32 %v499, 16
        %v508 = vshrl.u32 %v500, 16
        %v509 = vshrl.u32 %v501, 16
        %v510 = vshrl.u32 %v502, 16
        %v511 = vshrl.u32 %v503, 16
        %v512 = vshrl.u32 %v504, 16
        %v513 = vshrl.u32 %v505, 16
        %v514 = vxor.u32 %v498, %v506
        %v515 = vxor.u32 %v499, %v507
        %v516 = vxor.u32 %v500, %v508
        %v517 = vxor.u32 %v501, %v509
        %v518 = vxor.u32 %v502, %v510
        %v519 = vxor.u32 %v503, %v511
        %v520 = vxor.u32 %v504, %v512
        %v521 = vxor.u32 %v505, %v513
        %v522 = vmul.u32 %v514, 2246822507
        %v523 = vmul.u32 %v515, 2246822507
        %v524 = vmul.u32 %v516, 2246822507
        %v525 = vmul.u32 %v517, 2246822507
        %v526 = vmul.u32 %v518, 2246822507
        %v527 = vmul.u32 %v519, 2246822507
        %v528 = vmul.u32 %v520, 2246822507
        %v529 = vmul.u32 %v521, 2246822507
        %v530 = vshrl.u32 %v522, 13
        %v531 = vshrl.u32 %v523, 13
        %v532 = vshrl.u32 %v524, 13
        %v533 = vshrl.u32 %v525, 13
        %v534 = vshrl.u32 %v526, 13
        %v535 = vshrl.u32 %v527, 13
        %v536 = vshrl.u32 %v528, 13
        %v537 = vshrl.u32 %v529, 13
        %v538 = vxor.u32 %v522, %v530
        %v539 = vxor.u32 %v523, %v531
        %v540 = vxor.u32 %v524, %v532
        %v541 = vxor.u32 %v525, %v533
        %v542 = vxor.u32 %v526, %v534
        %v543 = vxor.u32 %v527, %v535
        %v544 = vxor.u32 %v528, %v536
        %v545 = vxor.u32 %v529, %v537
        %v546 = vmul.u32 %v538, 3266489909
        %v547 = vmul.u32 %v539, 3266489909
        %v548 = vmul.u32 %v540, 3266489909
        %v549 = vmul.u32 %v541, 3266489909
        %v550 = vmul.u32 %v542, 3266489909
        %v551 = vmul.u32 %v543, 3266489909
        %v552 = vmul.u32 %v544, 3266489909
        %v553 = vmul.u32 %v545, 3266489909
        %v554 = vshrl.u32 %v546, 16
        %v555 = vshrl.u32 %v547, 16
        %v556 = vshrl.u32 %v548, 16
        %v557 = vshrl.u32 %v549, 16
        %v558 = vshrl.u32 %v550, 16
        %v559 = vshrl.u32 %v551, 16
        %v560 = vshrl.u32 %v552, 16
        %v561 = vshrl.u32 %v553, 16
        %v562 = vxor.u32 %v546, %v554
        %v563 = vxor.u32 %v547, %v555
        %v564 = vxor.u32 %v548, %v556
        %v565 = vxor.u32 %v549, %v557
        %v566 = vxor.u32 %v550, %v558
        %v567 = vxor.u32 %v551, %v559
        %v568 = vxor.u32 %v552, %v560
        %v569 = vxor.u32 %v553, %v561
        %v570 = vand.u32 %v562, 8388607
        %v571 = vand.u32 %v563, 8388607
        %v572 = vand.u32 %v564, 8388607
        %v573 = vand.u32 %v565, 8388607
        %v574 = vand.u32 %v566, 8388607
        %v575 = vand.u32 %v567, 8388607
        %v576 = vand.u32 %v568, 8388607
        %v577 = vand.u32 %v569, 8388607
        %vm578 = vcmp.ge.s32.totalorder %v570, 2516582
        %vm579 = vcmp.ge.s32.totalorder %v571, 2516582
        %vm580 = vcmp.ge.s32.totalorder %v572, 2516582
        %vm581 = vcmp.ge.s32.totalorder %v573, 2516582
        %vm582 = vcmp.ge.s32.totalorder %v574, 2516582
        %vm583 = vcmp.ge.s32.totalorder %v575, 2516582
        %vm584 = vcmp.ge.s32.totalorder %v576, 2516582
        %vm585 = vcmp.ge.s32.totalorder %v577, 2516582
        %v586 = vmul.f32 %v402, %v449
        %v587 = vmul.f32 %v404, %v450
        %v588 = vmul.f32 %v406, %v451
        %v589 = vmul.f32 %v408, %v452
        %v590 = vmul.f32 %v410, %v453
        %v591 = vmul.f32 %v412, %v454
        %v592 = vmul.f32 %v414, %v455
        %v593 = vmul.f32 %v416, %v456
        %v594 = vsel %vm578, %v586, 0.0
        %v595 = vsel %vm579, %v587, 0.0
        %v596 = vsel %vm580, %v588, 0.0
        %v597 = vsel %vm581, %v589, 0.0
        %v598 = vsel %vm582, %v590, 0.0
        %v599 = vsel %vm583, %v591, 0.0
        %v600 = vsel %vm584, %v592, 0.0
        %v601 = vsel %vm585, %v593, 0.0
        %v602 = vpack.c.bf16 %v595, %v594
        %v603 = vpack.c.bf16 %v597, %v596
        %v604 = vpack.c.bf16 %v599, %v598
        %v605 = vpack.c.bf16 %v601, %v600
        %v606 = vpack.c.bf16 %v283, %v281
        %v607 = vpack.c.bf16 %v284, %v282
        %v608 = vpack.c.bf16 %v287, %v285
        %v609 = vpack.c.bf16 %v288, %v286
        %v611 = vsel %vm368, %v602, 0
        %v614 = vsel %vm368, %v603, 0
        %v617 = vsel %vm368, %v604, 0
        %v620 = vsel %vm368, %v605, 0
        %622 = vmatprep.subr.bf16.mxu0 %v607
        %623 = vmatpush1.bf16.msra.mxu0 %v606
        %624 = vmatprep.subr.bf16.mxu0 %v609
        %625 = vmatpush1.bf16.msra.mxu0 %v608
        %626 = vmatprep.subr.bf16.mxu0 0
        %627 = vmatpush1.bf16.msra.mxu0 0
        %628 = vmatprep.subr.bf16.mxu0 0
        %629 = vmatpush1.bf16.msra.mxu0 0
        %630 = vmatprep.subr.bf16.mxu0 0
        %631 = vmatpush1.bf16.msra.mxu0 0
        %632 = vmatprep.subr.bf16.mxu0 0
        %633 = vmatpush1.bf16.msra.mxu0 0
        %634 = vmatprep.subr.bf16.mxu0 0
        %635 = vmatpush1.bf16.msra.mxu0 0
        %636 = vmatprep.subr.bf16.mxu0 0
        %637 = vmatpush1.bf16.msra.mxu0 0
        %638 = vmatprep.subr.bf16.mxu0 0
        %639 = vmatpush1.bf16.msra.mxu0 0
        %640 = vmatprep.subr.bf16.mxu0 0
        %641 = vmatpush1.bf16.msra.mxu0 0
        %642 = vmatprep.subr.bf16.mxu0 0
        %643 = vmatpush1.bf16.msra.mxu0 0
        %644 = vmatprep.subr.bf16.mxu0 0
        %645 = vmatpush1.bf16.msra.mxu0 0
        %646 = vmatprep.subr.bf16.mxu0 0
        %647 = vmatpush1.bf16.msra.mxu0 0
        %648 = vmatprep.subr.bf16.mxu0 0
        %649 = vmatpush1.bf16.msra.mxu0 0
        %650 = vmatprep.subr.bf16.mxu0 0
        %651 = vmatpush1.bf16.msra.mxu0 0
        %652 = vmatprep.subr.bf16.mxu0 0
        %653 = vmatpush1.bf16.msra.mxu0 0
        %654 = vmatprep.mubr.bf16.mxu0 0
        %655 = vmatmul.mubr.bf16.gmra.mrb[0].mxu0 %v611
        %v656 = vpop.f32.mrb[0].mxu0
        %v657 = vadd.f32 0.0, %v656
        %v658 = vpop.f32.mrb[0].mxu0
        %v659 = vadd.f32 0.0, %v658
        %v660 = vpop.f32.mrb[0].mxu0
        %v661 = vadd.f32 0.0, %v660
        %v662 = vpop.f32.mrb[0].mxu0
        %v663 = vadd.f32 0.0, %v662
        %664 = vmatprep.mubr.bf16.mxu0 0
        %665 = vmatmul.mubr.bf16.gmra.mrb[0].mxu0 %v614
        %v666 = vpop.f32.mrb[0].mxu0
        %v667 = vadd.f32 0.0, %v666
        %v668 = vpop.f32.mrb[0].mxu0
        %v669 = vadd.f32 0.0, %v668
        %v670 = vpop.f32.mrb[0].mxu0
        %v671 = vadd.f32 0.0, %v670
        %v672 = vpop.f32.mrb[0].mxu0
        %v673 = vadd.f32 0.0, %v672
        %674 = vmatprep.mubr.bf16.mxu0 0
        %675 = vmatmul.mubr.bf16.gmra.mrb[0].mxu0 %v617
        %v676 = vpop.f32.mrb[0].mxu0
        %v677 = vadd.f32 0.0, %v676
        %v678 = vpop.f32.mrb[0].mxu0
        %v679 = vadd.f32 0.0, %v678
        %v680 = vpop.f32.mrb[0].mxu0
        %v681 = vadd.f32 0.0, %v680
        %v682 = vpop.f32.mrb[0].mxu0
        %v683 = vadd.f32 0.0, %v682
        %684 = vmatprep.mubr.bf16.mxu0 0
        %685 = vmatmul.mubr.bf16.gmra.mrb[0].mxu0 %v620
        %v686 = vpop.f32.mrb[0].mxu0
        %v687 = vadd.f32 0.0, %v686
        %v688 = vpop.f32.mrb[0].mxu0
        %v689 = vadd.f32 0.0, %v688
        %v690 = vpop.f32.mrb[0].mxu0
        %v691 = vadd.f32 0.0, %v690
        %v692 = vpop.f32.mrb[0].mxu0
        %v693 = vadd.f32 0.0, %v692
        %694 = vdwg.mxu0
        %695 = vst [vmem:[%s267] sm:$0xff] %v657
        %696 = vst [vmem:[%s267 + $0x8] sm:$0xff] %v659
        %697 = vst [vmem:[%s267 + $0x10] sm:$0xff] %v661
        %698 = vst [vmem:[%s267 + $0x18] sm:$0xff] %v663
        %699 = vst [vmem:[%s267 + $0x20] sm:$0xff] %v667
        %700 = vst [vmem:[%s267 + $0x28] sm:$0xff] %v669
        %701 = vst [vmem:[%s267 + $0x30] sm:$0xff] %v671
        %702 = vst [vmem:[%s267 + $0x38] sm:$0xff] %v673
        %703 = vst [vmem:[%s267 + $0x40] sm:$0xff] %v677
        %704 = vst [vmem:[%s267 + $0x48] sm:$0xff] %v679
        %705 = vst [vmem:[%s267 + $0x50] sm:$0xff] %v681
        %706 = vst [vmem:[%s267 + $0x58] sm:$0xff] %v683
        %707 = vst [vmem:[%s267 + $0x60] sm:$0xff] %v687
        %708 = vst [vmem:[%s267 + $0x68] sm:$0xff] %v689
        %709 = vst [vmem:[%s267 + $0x70] sm:$0xff] %v691
        %710 = vst [vmem:[%s267 + $0x78] sm:$0xff] %v693
        %s711 = sand.u32 %s111, 1
        %s712 = scalar_lea.sflag [#allocation6], %s711
        %s713 = sand.u32 %s111, 1
        %s714 = smul.addr %s713, 128
        %s715 = scalar_lea.vmem [#allocation10], %s714
        // Predicated region
        $region45: #{tpu_custom_call.1} parent=31 // pred_check
          %p716 = pneg %p121
        $region46: #{tpu_custom_call.1} parent=31 // pred_check_branch
          %718 = sbr.rel (%p716) target = $region48
        $region47: #{tpu_custom_call.1} parent=31 // pred_region
          %s720 = ssub.s32 2048, 2048
          %721 = vsyncadd %s712, %s720
          %s722 = smul.addr %s25, 16
          %s723 = smul.addr %s722, 128
          %s724 = scalar_lea.hbm %s4, %s723
          %s725 = sshll.u32 %s715, 4
          %s726 = int_to_ptr.vmem [resolvable:$true] %s725
          %731 = dma.vmem_to_hbm [thread:$0]  %s726, 2048, %s724, %s712, 256, 256, 16
        $region48: #{tpu_custom_call.1} parent=31 // pred_fallthru
          _
      $region32: #{tpu_custom_call.1} parent=5 // pred_fallthru
        _
      %p732 = scmp.le.s32.totalorder 2, %s20
      // Predicated region
      $region49: #{tpu_custom_call.1} parent=5 // pred_check
        %p733 = pneg %p732
      $region50: #{tpu_custom_call.1} parent=5 // pred_check_branch
        %735 = sbr.rel (%p733) target = $region52
      $region51: #{tpu_custom_call.1} parent=5 // pred_region
        %s736 = ssub.s32 %s20, 2
        // Predicated region
        $region53: #{tpu_custom_call.1} parent=51 // pred_check
          %p737 = pneg %p127
        $region54: #{tpu_custom_call.1} parent=51 // pred_check_branch
          %739 = sbr.rel (%p737) target = $region56
        $region55: #{tpu_custom_call.1} parent=51 // pred_region
          %s740 = sand.u32 %s112, 1
          %s741 = scalar_lea.sflag [#allocation6], %s740
          %s742 = sand.u32 %s112, 1
          %s743 = smul.addr %s742, 128
          %s744 = scalar_lea.vmem [#allocation10], %s743
          %745 = dma.done %s741, 2048
        $region56: #{tpu_custom_call.1} parent=51 // pred_fallthru
          _
      $region52: #{tpu_custom_call.1} parent=5 // pred_fallthru
        _
    $region6: #{tpu_custom_call.1} parent=1 // loop_footer
      %s24 = sadd.s32 1, %s20
    $region7: #{tpu_custom_call.1} parent=1 // loop_footer_branch
      %19 = sbr.rel target = $region3
    $region8: #{tpu_custom_call.1} parent=1 // loop_exit
      _
    %746 = vsyncpa [#allocation5], 1
    %s747 = scalar_lea.sflag [#allocation5], 1
    %748 = vsyncpa %s747, 1
    %749 = vsyncpa [#allocation8], 1
    %s750 = scalar_lea.sflag [#allocation8], 1
    %751 = vsyncpa %s750, 1
    %752 = vsyncpa [#allocation6], 1
    %s753 = scalar_lea.sflag [#allocation6], 1
    %754 = vsyncpa %s753, 1

</llo_original>
